<compile_context>
chip_gen: v6e
topology: v6e:2x2x1
jax: 0.10.0
libtpu: 0.0.40
codegen_flags: <defaults>
</compile_context>

<pallas_src>
import functools
import math

import numpy as np
import jax
import jax.numpy as jnp
from jax.experimental import pallas as pl
from jax.experimental.pallas import tpu as pltpu


# ----------------------------------------------------------------------------
# Helpers
# ----------------------------------------------------------------------------
def _vmem_limit_bytes():
    """~75% of physical VMEM, capped at 100 MiB.

    -> ~96 MiB on v5e/v6e (128 MiB parts), 48 MiB on v7x (64 MiB per core).
    """
    try:
        cap = pltpu.get_tpu_info().vmem_capacity_bytes
        return int(min(100 * 1024 * 1024, cap * 3 // 4))
    except Exception:
        return 48 * 1024 * 1024


def get_sinusoid_encoding_table(n_position, d_hid):
    # numpy glue, matches the PyTorch get_sinusoid_encoding_table
    pos = np.arange(n_position)[:, None].astype(np.float64)
    hid = np.arange(d_hid)[None, :]
    angle = pos / np.power(10000, 2 * (hid // 2) / d_hid)
    table = np.zeros((n_position, d_hid), dtype=np.float64)
    table[:, 0::2] = np.sin(angle[:, 0::2])
    table[:, 1::2] = np.cos(angle[:, 1::2])
    return jnp.asarray(table[None], dtype=jnp.float32)  # (1, N, D)


# ----------------------------------------------------------------------------
# Plain matmul kernel (encoder_to_decoder, bias-free)
# ----------------------------------------------------------------------------
def _matmul_kernel(x_ref, w_ref, o_ref):
    # bf16 cast happens in-kernel (VPU filler hidden under the DMA).
    o_ref[...] = jnp.dot(x_ref[...].astype(jnp.bfloat16), w_ref[...],
                         preferred_element_type=jnp.float32)


def pallas_matmul(x2d, w):
    # x2d: (M, K) f32, w: (K, N) bf16 -> (M, N) f32
    M, K = x2d.shape
    _, N = w.shape
    tm = M if M <= 256 else 256
    assert M % tm == 0
    return pl.pallas_call(
        _matmul_kernel,
        out_shape=jax.ShapeDtypeStruct((M, N), jnp.float32),
        grid=(M // tm,),
        in_specs=[
            pl.BlockSpec((tm, K), lambda i: (i, 0)),
            pl.BlockSpec((K, N), lambda i: (0, 0)),
        ],
        out_specs=pl.BlockSpec((tm, N), lambda i: (i, 0)),
        compiler_params=pltpu.CompilerParams(
            dimension_semantics=("parallel",),
            vmem_limit_bytes=_vmem_limit_bytes(),
        ),
    )(x2d, w)


# ----------------------------------------------------------------------------
# Fused decoder kernel: 4 transformer blocks + pixel head
# Grid = (batch tile [parallel], layer [arbitrary, innermost])
# ----------------------------------------------------------------------------
def _decoder_kernel(
    tok_ref,        # (N, D) f32   tokens of this batch tile (loaded at layer 0)
    smallp_ref,     # (1, 1, 9D+Dh) f32  packed LN gammas/betas + all biases
    qkvw_ref,       # (1, D, 3D)  bf16   (attn scale folded into Q columns)
    projw_ref,      # (1, D, D)   bf16
    fc1w_ref,       # (1, D, Dh)  bf16
    fc2w_ref,       # (1, Dh, D)  bf16
    headw_ref,      # (D, P)      bf16
    headb_ref,      # (1, P)      f32
    out_ref,        # (N, P)      f32   written at the last layer
    tok_sc,         # VMEM (N, D) f32   tokens resident across layers
    attn_sc,        # VMEM (N, D) bf16  attention head outputs (aligned stores)
    *, num_heads, head_dim, eps,
):
    layer = pl.program_id(1)

    @pl.when(layer == 0)
    def _():
        tok_sc[...] = tok_ref[...]

    x = tok_sc[...]                        # (N, D) f32
    D = x.shape[-1]
    Dh = fc1w_ref.shape[-1]

    # Packed small params: [ln1_g | ln1_b | qkv_b | proj_b | ln2_g | ln2_b | fc1_b | fc2_b]
    # All offsets are multiples of D=384 (a multiple of 128) -> aligned slices.
    sp = smallp_ref[0]                     # (1, 9D+Dh) f32
    ln1_g = sp[:, 0 * D:1 * D]
    ln1_b = sp[:, 1 * D:2 * D]
    qkv_b = sp[:, 2 * D:5 * D]
    proj_b = sp[:, 5 * D:6 * D]
    ln2_g = sp[:, 6 * D:7 * D]
    ln2_b = sp[:, 7 * D:8 * D]
    fc1_b = sp[:, 8 * D:8 * D + Dh]
    fc2_b = sp[:, 8 * D + Dh:9 * D + Dh]

    def layernorm(v, g, b):                # biased variance, eps=1e-6 (nn.LayerNorm)
        mu = jnp.mean(v, axis=-1, keepdims=True)
        var = jnp.mean(jnp.square(v - mu), axis=-1, keepdims=True)
        return (v - mu) * jax.lax.rsqrt(var + eps) * g + b

    # ---- Multi-head self-attention ---------------------------------------
    h = layernorm(x, ln1_g, ln1_b)
    qkv = jnp.dot(h.astype(jnp.bfloat16), qkvw_ref[0],
                  preferred_element_type=jnp.float32) + qkv_b        # (N, 3D) f32
    qkv = qkv.astype(jnp.bfloat16)

    # Heads processed in pairs: 2*head_dim == 128 lanes, so every q/k/v slice
    # and every attention-output store is 128-lane aligned.  Per-head score
    # separation inside a pair uses an exact 0/1 lane mask on K; the two PV
    # products are merged with one lane select.
    two_hd = 2 * head_dim
    n_pairs = num_heads // 2
    lane = jax.lax.broadcasted_iota(jnp.int32, (1, two_hd), 1)
    is_head_a = lane < head_dim                                      # (1, 128) bool
    m_a = is_head_a.astype(jnp.bfloat16)
    m_b = (lane >= head_dim).astype(jnp.bfloat16)

    def softmax(s):
        mx = jnp.max(s, axis=-1, keepdims=True)
        e = jnp.exp(s - mx)
        return e / jnp.sum(e, axis=-1, keepdims=True)

    for p in range(n_pairs):               # static: n_pairs is fixed by the arch (=3)
        c = p * two_hd
        q2 = qkv[:, c:c + two_hd]                      # (N, 128) heads (2p, 2p+1)
        k2 = qkv[:, D + c:D + c + two_hd]
        v2 = qkv[:, 2 * D + c:2 * D + c + two_hd]

        s_a = jax.lax.dot_general(q2, k2 * m_a, (((1,), (1,)), ((), ())),
                                  preferred_element_type=jnp.float32)   # (N, N)
        s_b = jax.lax.dot_general(q2, k2 * m_b, (((1,), (1,)), ((), ())),
                                  preferred_element_type=jnp.float32)
        p_a = softmax(s_a).astype(jnp.bfloat16)
        p_b = softmax(s_b).astype(jnp.bfloat16)
        o_a = jnp.dot(p_a, v2, preferred_element_type=jnp.float32)   # [pA@vA | pA@vB]
        o_b = jnp.dot(p_b, v2, preferred_element_type=jnp.float32)   # [pB@vA | pB@vB]
        o = jnp.where(is_head_a, o_a, o_b)                           # [pA@vA | pB@vB]
        attn_sc[:, c:c + two_hd] = o.astype(jnp.bfloat16)

    y = jnp.dot(attn_sc[...], projw_ref[0],
                preferred_element_type=jnp.float32) + proj_b
    x = x + y                              # residual 1 (dropout / drop_path = identity)

    # ---- LayerNorm 2 + MLP (exact-erf GELU, matching nn.GELU default) ----
    h2 = layernorm(x, ln2_g, ln2_b)
    h2 = jnp.dot(h2.astype(jnp.bfloat16), fc1w_ref[0],
                 preferred_element_type=jnp.float32) + fc1_b
    # TODO(synk): approximate=True (tanh) would offload GELU to the EUP and
    # relieve v5e's f32 VALU slots, but deviates from nn.GELU's exact-erf default.
    h2 = jax.nn.gelu(h2, approximate=False)
    h2 = jnp.dot(h2.astype(jnp.bfloat16), fc2w_ref[0],
                 preferred_element_type=jnp.float32) + fc2_b
    x = x + h2                             # residual 2

    tok_sc[...] = x

    # ---- Pixel head fused into the last layer's step (lane-dense P=128) ----
    @pl.when(layer == pl.num_programs(1) - 1)
    def _():
        out_ref[...] = jnp.dot(x.astype(jnp.bfloat16), headw_ref[...],
                               preferred_element_type=jnp.float32) + headb_ref[...]


def fused_decoder(tokens, params, *, B, N, num_heads, eps=1e-6):
    BN, D = tokens.shape
    assert BN == B * N
    L = params["qkv_w"].shape[0]
    Dh = params["fc1_w"].shape[-1]
    P = params["head_w"].shape[-1]
    SW = params["smallp"].shape[-1]
    head_dim = D // num_heads
    assert num_heads % 2 == 0 and 2 * head_dim == 128, \
        "pair-of-heads attention path assumes head_dim == 64"

    kernel = functools.partial(_decoder_kernel, num_heads=num_heads,
                               head_dim=head_dim, eps=eps)

    def layer_spec(shape):   # stacked per-layer weight slab, selected by layer axis
        return pl.BlockSpec((1,) + shape, lambda b, l: (l,) + (0,) * len(shape))

    def row_spec(cols):      # per-batch row tile, constant across the layer axis
        return pl.BlockSpec((N, cols), lambda b, l: (b, 0))

    def fixed_spec(shape):   # constant block -> DMA'd once
        return pl.BlockSpec(shape, lambda b, l: (0,) * len(shape))

    # Grid: batch tiles ("parallel": sharded across v7x's two TensorCores) x
    # layers ("arbitrary", innermost: next layer's weights prefetched while the
    # current layer computes; tokens stay resident in the VMEM scratch).
    # TODO(synk): for real VideoMAE shapes (N=1568, large B) also tile N
    # (flash-style) so per-tile scores/intermediates fit v7x's 64 MiB VMEM, and
    # feed more rows per call so per-layer compute covers the weight DMA.
    return pl.pallas_call(
        kernel,
        out_shape=jax.ShapeDtypeStruct((BN, P), jnp.float32),
        grid=(B, L),
        in_specs=[
            row_spec(D),
            layer_spec((1, SW)),
            layer_spec((D, 3 * D)),
            layer_spec((D, D)),
            layer_spec((D, Dh)),
            layer_spec((Dh, D)),
            fixed_spec((D, P)),
            fixed_spec((1, P)),
        ],
        out_specs=row_spec(P),
        scratch_shapes=[
            pltpu.VMEM((N, D), jnp.float32),     # resident tokens
            pltpu.VMEM((N, D), jnp.bfloat16),    # attention head outputs
        ],
        compiler_params=pltpu.CompilerParams(
            dimension_semantics=("parallel", "arbitrary"),
            vmem_limit_bytes=_vmem_limit_bytes(),
        ),
    )(
        tokens,
        params["smallp"],
        params["qkv_w"], params["proj_w"],
        params["fc1_w"], params["fc2_w"],
        params["head_w"], params["head_b"],
    )


# ----------------------------------------------------------------------------
# Parameter construction (deterministic, mirrors module __init__ / _init_weights)
# ----------------------------------------------------------------------------
def make_params(key, *, enc_dim, dec_dim, num_heads, depth, num_patches,
                patch_size, tubelet_size, mlp_ratio=4):
    D = dec_dim
    Dh = int(D * mlp_ratio)
    head_dim = D // num_heads
    out_dim = 3 * tubelet_size * patch_size ** 2
    P = ((out_dim + 127) // 128) * 128          # lane-dense padded head width
    keys = jax.random.split(key, depth * 4 + 2)

    def xavier(k, out_f, in_f):
        val = math.sqrt(6.0 / float(in_f + out_f))
        return jax.random.uniform(k, (out_f, in_f), jnp.float32, -val, val)

    # Fold attention scale (head_dim**-0.5 == 1/8, exact power of two) into the
    # Q block of the qkv weight (and bias, which is zero at init anyway).
    scale = head_dim ** (-0.5)

    qkv_w, proj_w, fc1_w, fc2_w = [], [], [], []
    for i in range(depth):
        kq, kp, k1, k2 = keys[2 + 4 * i: 2 + 4 * (i + 1)]
        # module's _init_weights for 'qkv': val = sqrt(6 / (shape[0]//3 + shape[1]))
        val = math.sqrt(6.0 / float(D + D))
        w = jax.random.uniform(kq, (3 * D, D), jnp.float32, -val, val).T   # (D, 3D)
        w = w.at[:, :D].multiply(scale)                                    # scale -> Q block
        qkv_w.append(w)
        proj_w.append(xavier(kp, D, D).T)
        fc1_w.append(xavier(k1, Dh, D).T)
        fc2_w.append(xavier(k2, D, Dh).T)

    head_w = jnp.zeros((D, P), jnp.float32).at[:, :out_dim].set(
        xavier(keys[1], out_dim, D).T
    )

    # Packed small per-layer params -> one DMA per layer step instead of 10:
    # [ln1_g | ln1_b | qkv_b (Q third scaled; zeros at init) | proj_b |
    #  ln2_g | ln2_b | fc1_b | fc2_b]
    layer_row = jnp.concatenate([
        jnp.ones((1, D), jnp.float32),        # ln1 gamma
        jnp.zeros((1, D), jnp.float32),       # ln1 beta
        jnp.zeros((1, 3 * D), jnp.float32),   # qkv bias = cat(q_bias, 0, v_bias) -> zeros
        jnp.zeros((1, D), jnp.float32),       # proj bias
        jnp.ones((1, D), jnp.float32),        # ln2 gamma
        jnp.zeros((1, D), jnp.float32),       # ln2 beta
        jnp.zeros((1, Dh), jnp.float32),      # fc1 bias
        jnp.zeros((1, D), jnp.float32),       # fc2 bias
    ], axis=-1)
    smallp = jnp.tile(layer_row[None], (depth, 1, 1))      # (L, 1, 9D+Dh)

    wdt = jnp.bfloat16   # bf16 weights; f32 accumulation / LN / softmax inside kernel
    return {
        # nn.Linear(encoder_embed_dim, decoder_embed_dim, bias=False), xavier init.
        "e2d_w": xavier(keys[0], D, enc_dim).T.astype(wdt),      # (E, D)
        "mask_token": jnp.zeros((1, 1, D), jnp.float32),         # torch.zeros init
        "pos_embed": get_sinusoid_encoding_table(num_patches, D),
        "head_w": head_w.astype(wdt),                            # (D, P) padded
        "head_b": jnp.zeros((1, P), jnp.float32),
        "smallp": smallp,
        # Per-layer big weights stacked with a leading "layer" axis:
        "qkv_w": jnp.stack(qkv_w).astype(wdt),                   # (L, D, 3D)
        "proj_w": jnp.stack(proj_w).astype(wdt),                 # (L, D, D)
        "fc1_w": jnp.stack(fc1_w).astype(wdt),                   # (L, D, Dh)
        "fc2_w": jnp.stack(fc2_w).astype(wdt),                   # (L, Dh, D)
    }


# ----------------------------------------------------------------------------
# Forward pass (mirrors VitVideoMAEDecoder.forward)
# ----------------------------------------------------------------------------
def vit_videomae_decoder_forward(x, mask, params, *, num_heads, out_dim):
    # x: (B, N_vis, E) visible-token features; mask: (B, num_patches) bool.
    B, N_vis, E = x.shape
    N = mask.shape[1]
    D = params["e2d_w"].shape[1]

    # encoder_to_decoder (Pallas matmul, no bias, in-kernel bf16 cast)
    x_dec = pallas_matmul(x.reshape(B * N_vis, E), params["e2d_w"])

    # tokens = mask_token.repeat(...); tokens[mask] = x.flatten(0,1)
    # TODO(synk): data-dependent boolean scatter/gather stays in plain JAX; it
    # assumes exactly N_vis True entries per mask row (same implicit assumption
    # as the PyTorch module's tokens[mask] = x.flatten(0,1)).
    tokens = jnp.broadcast_to(params["mask_token"], (B, N, D)).reshape(B * N, D)
    flat_mask = mask.reshape(-1)
    vis_idx = jnp.nonzero(flat_mask, size=B * N_vis)[0]
    tokens = tokens.at[vis_idx].set(x_dec)
    tokens = (tokens.reshape(B, N, D) + params["pos_embed"]).reshape(B * N, D)

    # 4 fused transformer blocks + pixel head in ONE pallas_call
    pre = fused_decoder(tokens, params, B=B, N=N, num_heads=num_heads)  # (B*N, P)
    pre = pre[:, :out_dim]

    # pre_pixels = pre_pixels[~mask].view(B, -1, out_dim)
    n_masked = N - N_vis
    inv_idx = jnp.nonzero(~flat_mask, size=B * n_masked)[0]
    return pre[inv_idx].reshape(B, n_masked, out_dim)


# ----------------------------------------------------------------------------
# Main
# ----------------------------------------------------------------------------
if __name__ == "__main__":
    # Small but module-consistent configuration.
    B = 2               # batch
    num_patches = 16    # total tokens per clip
    N_vis = 8           # visible tokens (mask has 8 True per row)
    enc_dim = 64        # encoder_embed_dim (cfg.VIDEO.BACKBONE.NUM_FEATURES)
    dec_dim = 384       # decoder_embed_dim (hard-coded in module)
    num_heads = 6
    depth = 4
    patch_size = 4
    tubelet_size = 2
    out_dim = 3 * tubelet_size * patch_size ** 2   # 96

    key = jax.random.PRNGKey(0)
    kp, kx, km = jax.random.split(key, 3)

    params = make_params(
        kp, enc_dim=enc_dim, dec_dim=dec_dim, num_heads=num_heads, depth=depth,
        num_patches=num_patches, patch_size=patch_size, tubelet_size=tubelet_size,
    )

    # Deterministic visible-token features.
    x = jax.random.normal(kx, (B, N_vis, enc_dim), jnp.float32)

    # Deterministic boolean mask with exactly N_vis True per row.
    mask_rows = []
    for b in range(B):
        perm = jax.random.permutation(jax.random.fold_in(km, b), num_patches)
        row = jnp.zeros((num_patches,), bool).at[perm[:N_vis]].set(True)
        mask_rows.append(row)
    mask = jnp.stack(mask_rows, axis=0)

    out = vit_videomae_decoder_forward(
        x, mask, params, num_heads=num_heads, out_dim=out_dim
    )
    out = jax.block_until_ready(out)

    expected_shape = (B, num_patches - N_vis, out_dim)
    assert out.shape == expected_shape, (out.shape, expected_shape)
    assert bool(jnp.all(jnp.isfinite(out)))
    print("KERNEL_OK")
</pallas_src>

<mosaic_0001>
module attributes {stable_mosaic.version = 11 : i64} {
  func.func @_matmul_kernel(%arg0: i32, %arg1: memref<16x64xf32, #tpu.memory_space<vmem>>, %arg2: memref<64x384xbf16, #tpu.memory_space<vmem>>, %arg3: memref<16x384xf32, #tpu.memory_space<vmem>>) attributes {dimension_semantics = [#tpu.dimension_semantics<parallel>], iteration_bounds = array<i64: 1>, scalar_prefetch = 0 : i64, scratch_operands = 0 : i64, tpu.core_type = #tpu.core_type<tc>, window_params = [{transform_indices = @transform_0, window_bounds = array<i64: 16, 64>}, {pipeline_mode = #tpu.pipeline_mode<synchronous>, transform_indices = @transform_1, window_bounds = array<i64: 64, 384>}, {transform_indices = @transform_2, window_bounds = array<i64: 16, 384>}]} {
    %c0 = arith.constant 0 : index
    %c0_0 = arith.constant 0 : index
    %0 = vector.load %arg1[%c0, %c0_0] : memref<16x64xf32, #tpu.memory_space<vmem>>, vector<16x64xf32>
    %1 = arith.truncf %0 : vector<16x64xf32> to vector<16x64xbf16>
    %c0_1 = arith.constant 0 : index
    %c0_2 = arith.constant 0 : index
    %2 = vector.load %arg2[%c0_1, %c0_2] : memref<64x384xbf16, #tpu.memory_space<vmem>>, vector<64x384xbf16>
    %cst = arith.constant dense<0.000000e+00> : vector<16x384xf32>
    %3 = tpu.matmul %1, %2, %cst {dimension_numbers = #tpu.dot_dimension_numbers<[1], [0], [0], [1], [0, 0, 1, 1], [], []>} : vector<16x64xbf16>, vector<64x384xbf16>, vector<16x384xf32> -> vector<16x384xf32>
    %c0_3 = arith.constant 0 : index
    %c0_4 = arith.constant 0 : index
    %4 = vector.load %arg3[%c0_3, %c0_4] : memref<16x384xf32, #tpu.memory_space<vmem>>, vector<16x384xf32>
    tpu.vector_store %arg3[%c0_3, %c0_4], %3 {strides = array<i32>} : memref<16x384xf32, #tpu.memory_space<vmem>>, vector<16x384xf32>,
    return
  }
  func.func @transform_0(%arg0: i32) -> (i32, i32) {
    %c0_i32 = arith.constant 0 : i32
    %c0_i32_0 = arith.constant 0 : i32
    return %arg0, %c0_i32 : i32, i32
  }
  func.func @transform_1(%arg0: i32) -> (i32, i32) {
    %c0_i32 = arith.constant 0 : i32
    %c0_i32_0 = arith.constant 0 : i32
    %c0_i32_1 = arith.constant 0 : i32
    return %c0_i32, %c0_i32_0 : i32, i32
  }
  func.func @transform_2(%arg0: i32) -> (i32, i32) {
    %c0_i32 = arith.constant 0 : i32
    %c0_i32_0 = arith.constant 0 : i32
    return %arg0, %c0_i32 : i32, i32
  }
}

</mosaic_0001>

<llo_original>
// kernel: tpu_custom_call.1
$region0: #{tpu_custom_call.1}
  #allocation0 [shape = 'u32[]', space=smem, size = 0x4, offset = 0x4, fixed_abs, tag = 'smem constant byte address 0x4 - core index']
  #allocation1 [shape = 'u32[144,128]{1,0:T(1,128)}', space=vmem, size = 0x12000, scoped, tag = 'internal scratch']
  %s0 = inlined_call_operand.hbm [shape: f32[16,64], index: 0, kind: input, shape index: {}]
  %s1 = inlined_call_operand.hbm [shape: bf16[64,384], index: 1, kind: input, shape index: {}]
  %s2 = inlined_call_operand.hbm [shape: f32[16,384], index: 2, kind: output, shape index: {}]
  %s3 = sld [smem:[#allocation0]]
  $region26: #{tpu_custom_call.1} parent=0
    _
  %s5 = ssub.s32 1, %s3
  %s6 = scalar_select 0, %s5, %s3
  $region1: #{tpu_custom_call.1} parent=0
    #allocation2 [shape = 'u8[8192]{0}', space=vmem, size = 0x2000, scoped, tag = 'input window, operand 0, single buffered']
    #allocation3 [shape = 's32[1]{0}', space=sflag, size = 0x4, scoped, tag = 'scoped memory for tpu_custom_call.1']
    #allocation4 [shape = 's32[1]{0}', space=sflag, size = 0x4, scoped, tag = 'scoped memory for tpu_custom_call.1']
    #allocation5 [shape = 'u8[49152]{0}', space=vmem, size = 0xc000, scoped, tag = 'input window, operand 1, single buffered']
    #allocation6 [shape = 's32[1]{0}', space=sflag, size = 0x4, scoped, tag = 'scoped memory for tpu_custom_call.1']
    #allocation7 [shape = 'u8[24576]{0}', space=vmem, size = 0x6000, scoped, tag = 'output window, operand 0, single buffered']
    %7 = vsyncpa [#allocation3], 0
    %8 = vsyncpa [#allocation6], 0
    %9 = vsyncpa [#allocation4], 0
    // Predicated region
    $region2: #{tpu_custom_call.1} parent=1 // pred_check
      _
    $region3: #{tpu_custom_call.1} parent=1 // pred_check_branch
      %11 = sbr.rel (0) target = $region5
    $region4: #{tpu_custom_call.1} parent=1 // pred_region
      %s13 = ssub.s32 256, 256
      %14 = vsyncadd [#allocation3], %s13
      %s15 = sshll.u32 [#allocation2], 4
      %s16 = int_to_ptr.vmem [resolvable:$true] %s15
      %21 = dma.hbm_to_vmem [thread:$0]  %s0, 256, %s16, [#allocation3], 128, 128, 8
    $region5: #{tpu_custom_call.1} parent=1 // pred_fallthru
      _
    // Predicated region
    $region6: #{tpu_custom_call.1} parent=1 // pred_check
      _
    $region7: #{tpu_custom_call.1} parent=1 // pred_check_branch
      %23 = sbr.rel (0) target = $region9
    $region8: #{tpu_custom_call.1} parent=1 // pred_region
      %s25 = ssub.s32 1536, 1536
      %26 = vsyncadd [#allocation6], %s25
      %s27 = sshll.u32 [#allocation5], 4
      %s28 = int_to_ptr.vmem [resolvable:$true] %s27
      %33 = dma.hbm_to_vmem [thread:$0]  %s1, 1536, %s28, [#allocation6], 192, 192, 12
    $region9: #{tpu_custom_call.1} parent=1 // pred_fallthru
      _
    // Predicated region
    $region10: #{tpu_custom_call.1} parent=1 // pred_check
      _
    $region11: #{tpu_custom_call.1} parent=1 // pred_check_branch
      %35 = sbr.rel (0) target = $region13
    $region12: #{tpu_custom_call.1} parent=1 // pred_region
      %36 = dma.done [#allocation3], 256
    $region13: #{tpu_custom_call.1} parent=1 // pred_fallthru
      _
    // Predicated region
    $region14: #{tpu_custom_call.1} parent=1 // pred_check
      _
    $region15: #{tpu_custom_call.1} parent=1 // pred_check_branch
      %38 = sbr.rel (0) target = $region17
    $region16: #{tpu_custom_call.1} parent=1 // pred_region
      %39 = dma.done [#allocation6], 1536
    $region17: #{tpu_custom_call.1} parent=1 // pred_fallthru
      _
    %v41 = vld [vmem:[#allocation2] sm:$0xff]
    %v42 = vld [vmem:[#allocation2 + $0x8] sm:$0xff]
    %v43 = vpack.c.bf16 %v42, %v41
    %v44 = vld [vmem:[#allocation5] sm:$0xff]
    %v45 = vld [vmem:[#allocation5 + $0x8] sm:$0xf]
    %v46 = vld [vmem:[#allocation5 + $0xc] sm:$0xff]
    %v47 = vld [vmem:[#allocation5 + $0x14] sm:$0xf]
    %v48 = vld [vmem:[#allocation5 + $0x18] sm:$0xff]
    %v49 = vld [vmem:[#allocation5 + $0x20] sm:$0xf]
    %v50 = vld [vmem:[#allocation5 + $0x24] sm:$0xff]
    %v51 = vld [vmem:[#allocation5 + $0x2c] sm:$0xf]
    %v52 = vld [vmem:[#allocation5 + $0x30] sm:$0xff]
    %v53 = vld [vmem:[#allocation5 + $0x38] sm:$0xf]
    %v54 = vld [vmem:[#allocation5 + $0x3c] sm:$0xff]
    %v55 = vld [vmem:[#allocation5 + $0x44] sm:$0xf]
    %v56 = vld [vmem:[#allocation5 + $0x48] sm:$0xff]
    %v57 = vld [vmem:[#allocation5 + $0x50] sm:$0xf]
    %v58 = vld [vmem:[#allocation5 + $0x54] sm:$0xff]
    %v59 = vld [vmem:[#allocation5 + $0x5c] sm:$0xf]
    %v76 = vunpack.c.l.b16 %v44
    %v77 = vunpack.c.h.b16 %v44
    %v78 = vunpack.c.l.b16 %v45
    %v79 = vunpack.c.l.b16 %v46
    %v80 = vunpack.c.h.b16 %v46
    %v81 = vunpack.c.l.b16 %v47
    %v82 = vunpack.c.l.b16 %v48
    %v83 = vunpack.c.h.b16 %v48
    %v84 = vunpack.c.l.b16 %v49
    %v85 = vunpack.c.l.b16 %v50
    %v86 = vunpack.c.h.b16 %v50
    %v87 = vunpack.c.l.b16 %v51
    %v88 = vunpack.c.l.b16 %v52
    %v89 = vunpack.c.h.b16 %v52
    %v90 = vunpack.c.l.b16 %v53
    %v91 = vunpack.c.l.b16 %v54
    %v92 = vunpack.c.h.b16 %v54
    %v93 = vunpack.c.l.b16 %v55
    %v94 = vunpack.c.l.b16 %v56
    %v95 = vunpack.c.h.b16 %v56
    %v96 = vunpack.c.l.b16 %v57
    %v97 = vunpack.c.l.b16 %v58
    %v98 = vunpack.c.h.b16 %v58
    %v99 = vunpack.c.l.b16 %v59
    %v100 = vpack.c.b16 %v79, %v76
    %v101 = vpack.c.b16 %v80, %v77
    %v102 = vpack.c.b16 %v81, %v78
    %v103 = vpack.c.b16 %v85, %v82
    %v104 = vpack.c.b16 %v86, %v83
    %v105 = vpack.c.b16 %v87, %v84
    %v106 = vpack.c.b16 %v91, %v88
    %v107 = vpack.c.b16 %v92, %v89
    %v108 = vpack.c.b16 %v93, %v90
    %v109 = vpack.c.b16 %v97, %v94
    %v110 = vpack.c.b16 %v98, %v95
    %v111 = vpack.c.b16 %v99, %v96
    %vm124 = vcmask 523264
    %v126 = vsel %vm124, %v43, 0
    %128 = vmatprep.subr.bf16.mxu0 0
    %129 = vmatpush1.bf16.msra.mxu0 0
    %130 = vmatprep.subr.bf16.mxu0 0
    %131 = vmatpush1.bf16.msra.mxu0 0
    %132 = vmatprep.subr.bf16.mxu0 0
    %133 = vmatpush1.bf16.msra.mxu0 0
    %134 = vmatprep.subr.bf16.mxu0 0
    %135 = vmatpush1.bf16.msra.mxu0 0
    %136 = vmatprep.subr.bf16.mxu0 %v110
    %137 = vmatpush1.bf16.msra.mxu0 %v109
    %138 = vmatprep.subr.bf16.mxu0 %v107
    %139 = vmatpush1.bf16.msra.mxu0 %v106
    %140 = vmatprep.subr.bf16.mxu0 %v104
    %141 = vmatpush1.bf16.msra.mxu0 %v103
    %142 = vmatprep.subr.bf16.mxu0 %v101
    %143 = vmatpush1.bf16.msra.mxu0 %v100
    %144 = vmatprep.subr.bf16.mxu0 0
    %145 = vmatpush2.bf16.msra.mxu0 0
    %146 = vmatprep.subr.bf16.mxu0 0
    %147 = vmatpush2.bf16.msra.mxu0 0
    %148 = vmatprep.subr.bf16.mxu0 0
    %149 = vmatpush2.bf16.msra.mxu0 0
    %150 = vmatprep.subr.bf16.mxu0 0
    %151 = vmatpush2.bf16.msra.mxu0 0
    %152 = vmatprep.subr.bf16.mxu0 0
    %153 = vmatpush2.bf16.msra.mxu0 0
    %154 = vmatprep.subr.bf16.mxu0 0
    %155 = vmatpush2.bf16.msra.mxu0 0
    %156 = vmatprep.subr.bf16.mxu0 0
    %157 = vmatpush2.bf16.msra.mxu0 0
    %158 = vmatprep.subr.bf16.mxu0 0
    %159 = vmatpush2.bf16.msra.mxu0 0
    %160 = vmatprep.mubr.bf16.mxu0 0
    %161 = vmatmul.mubr.bf16.gmra.mxu0 %v126
    %v162 = vpop.f32.mrf.mxu0
    %v163 = vadd.f32 0.0, %v162
    %v164 = vpop.f32.mrf.mxu0
    %v165 = vadd.f32 0.0, %v164
    %v166 = vpop.f32.mrf.mxu0
    %v167 = vadd.f32 0.0, %v166
    %v168 = vpop.f32.mrf.mxu0
    %v169 = vadd.f32 0.0, %v168
    %170 = vdwg.mxu0
    %171 = vmatprep.subr.bf16.mxu0 0
    %172 = vmatpush1.bf16.msra.mxu0 0
    %173 = vmatprep.subr.bf16.mxu0 0
    %174 = vmatpush1.bf16.msra.mxu0 0
    %175 = vmatprep.subr.bf16.mxu0 0
    %176 = vmatpush1.bf16.msra.mxu0 0
    %177 = vmatprep.subr.bf16.mxu0 0
    %178 = vmatpush1.bf16.msra.mxu0 0
    %179 = vmatprep.subr.bf16.mxu0 0
    %180 = vmatpush1.bf16.msra.mxu0 %v111
    %181 = vmatprep.subr.bf16.mxu0 0
    %182 = vmatpush1.bf16.msra.mxu0 %v108
    %183 = vmatprep.subr.bf16.mxu0 0
    %184 = vmatpush1.bf16.msra.mxu0 %v105
    %185 = vmatprep.subr.bf16.mxu0 0
    %186 = vmatpush1.bf16.msra.mxu0 %v102
    %187 = vmatprep.subr.bf16.mxu0 0
    %188 = vmatpush2.bf16.msra.mxu0 0
    %189 = vmatprep.subr.bf16.mxu0 0
    %190 = vmatpush2.bf16.msra.mxu0 0
    %191 = vmatprep.subr.bf16.mxu0 0
    %192 = vmatpush2.bf16.msra.mxu0 0
    %193 = vmatprep.subr.bf16.mxu0 0
    %194 = vmatpush2.bf16.msra.mxu0 0
    %195 = vmatprep.subr.bf16.mxu0 0
    %196 = vmatpush2.bf16.msra.mxu0 0
    %197 = vmatprep.subr.bf16.mxu0 0
    %198 = vmatpush2.bf16.msra.mxu0 0
    %199 = vmatprep.subr.bf16.mxu0 0
    %200 = vmatpush2.bf16.msra.mxu0 0
    %201 = vmatprep.subr.bf16.mxu0 0
    %202 = vmatpush2.bf16.msra.mxu0 0
    %203 = vmatprep.mubr.bf16.mxu0 0
    %204 = vmatmul.mubr.bf16.gmra.mxu0 %v126
    %v205 = vpop.f32.mrf.mxu0
    %v206 = vadd.f32 0.0, %v205
    %v207 = vpop.f32.mrf.mxu0
    %v208 = vpop.f32.mrf.mxu0
    %v209 = vadd.f32 0.0, %v208
    %v210 = vpop.f32.mrf.mxu0
    %211 = vdwg.mxu0
    %212 = vst [vmem:[#allocation7] sm:$0xff] %v163
    %213 = vst [vmem:[#allocation7 + $0x8] sm:$0xff] %v165
    %214 = vst [vmem:[#allocation7 + $0x10] sm:$0xff] %v206
    %215 = vst [vmem:[#allocation7 + $0x18] sm:$0xff] %v167
    %216 = vst [vmem:[#allocation7 + $0x20] sm:$0xff] %v169
    %217 = vst [vmem:[#allocation7 + $0x28] sm:$0xff] %v209
    // Predicated region
    $region18: #{tpu_custom_call.1} parent=1 // pred_check
      _
    $region19: #{tpu_custom_call.1} parent=1 // pred_check_branch
      %219 = sbr.rel (0) target = $region21
    $region20: #{tpu_custom_call.1} parent=1 // pred_region
      %s221 = ssub.s32 768, 768
      %222 = vsyncadd [#allocation4], %s221
      %s223 = sshll.u32 [#allocation7], 4
      %s224 = int_to_ptr.vmem [resolvable:$true] %s223
      %229 = dma.vmem_to_hbm [thread:$0]  %s224, 768, %s2, [#allocation4], 384, 384, 24
    $region21: #{tpu_custom_call.1} parent=1 // pred_fallthru
      _
    // Predicated region
    $region22: #{tpu_custom_call.1} parent=1 // pred_check
      _
    $region23: #{tpu_custom_call.1} parent=1 // pred_check_branch
      %231 = sbr.rel (0) target = $region25
    $region24: #{tpu_custom_call.1} parent=1 // pred_region
      %232 = dma.done [#allocation4], 768
    $region25: #{tpu_custom_call.1} parent=1 // pred_fallthru
      _
    %233 = vsyncpa [#allocation3], 1
    %234 = vsyncpa [#allocation6], 1
    %235 = vsyncpa [#allocation4], 1

</llo_original>
